<compile_context>
chip_gen: v5e
topology: v5e:2x2
jax: 0.10.0
libtpu: 0.0.40
codegen_flags: <defaults>
</compile_context>

<pallas_src>
import functools
import math

import jax
import jax.numpy as jnp
from jax import lax
from jax.experimental import pallas as pl
from jax.experimental.pallas import tpu as pltpu


# -----------------------------------------------------------------------------
# Tempered-math helpers.  Temperatures are static Python floats, so every
# t-branch resolves at trace time.  pow is expressed via exp/log (EUP) with
# cheap special cases; bases are always >= 0 in this loss.
# -----------------------------------------------------------------------------
def _pow(x, p):
    """x ** p for x >= 0 (f32), p a static Python float.  0 ** p -> 0."""
    p = float(p)
    if p == 1.0:
        return x
    if p == 2.0:
        return x * x
    if p == 3.0:
        return x * x * x
    if p == 0.5:
        return jnp.sqrt(x)
    safe = jnp.maximum(x, 1e-38)
    return jnp.where(x > 0.0, jnp.exp(p * jnp.log(safe)), 0.0)


def _log_t(u, t):
    if t == 1.0:
        return jnp.log(u)
    return (_pow(u, 1.0 - t) - 1.0) / (1.0 - t)


def _exp_t(u, t):
    if t == 1.0:
        return jnp.exp(u)
    return _pow(jnp.maximum(1.0 + (1.0 - t) * u, 0.0), 1.0 / (1.0 - t))


def _log_t_const(u, t):
    """Trace-time (Python float) log_t."""
    if t == 1.0:
        return math.log(u)
    return (u ** (1.0 - t) - 1.0) / (1.0 - t)


def _tempered_softmax(pred, t2, num_iters):
    """Tempered softmax along the class axis of a (TILE_N, C) f32 tile.

    Returns (probs, pow_fn, logp_fn):
      probs      : the tempered probabilities tile
      pow_fn(p)  : probs ** p, reusing the already-computed log of the exp_t
                   base (one exp per call instead of log+exp)
      logp_fn()  : natural log of probs (same log reuse), used for t1 == 1.
    """
    if t2 == 1.0:
        m = jnp.max(pred, axis=1, keepdims=True)
        shifted = pred - m
        e = jnp.exp(shifted)
        s = jnp.sum(e, axis=1, keepdims=True)
        log_probs = shifted - jnp.log(s)          # reused for probs powers
        probs = e * (1.0 / s)                     # per-row reciprocal, bcast mul

        def pow_fn(p):
            if p == 1.0:
                return probs
            return jnp.exp(jnp.float32(p) * log_probs)

        return probs, pow_fn, (lambda: log_probs)

    one_m_t2 = 1.0 - t2
    mu = jnp.max(pred, axis=1, keepdims=True)
    na0 = pred - mu

    if t2 > 1.0:
        # Fixed-point normalization (heavy tails), num_iters unrolled.
        na = na0
        for _ in range(num_iters):
            z = jnp.sum(_exp_t(na, t2), axis=1, keepdims=True)
            na = na0 * _pow(z, one_m_t2)
        z = jnp.sum(_exp_t(na, t2), axis=1, keepdims=True)
        # exp_t(pred - norm) with norm = -log_t(1/z) + mu has base
        #   1 + (1-t2)*(pred - norm) = (1-t2)*na0 + z**(t2-1)   (> 0 for t2>1);
        # identical math to the reference, just expressed on the base directly
        # so the log below can be shared by every subsequent power of probs.
        base = one_m_t2 * na0 + _pow(z, t2 - 1.0)
    else:
        # Binary-search normalization (finite support, t2 < 1), unrolled.
        thresh = -1.0 / one_m_t2
        eff_dim = jnp.sum((na0 > thresh).astype(jnp.float32), axis=1,
                          keepdims=True)
        lower = jnp.zeros_like(mu)
        upper = -_log_t(1.0 / eff_dim, t2)
        for _ in range(num_iters):
            mid = (upper + lower) * 0.5
            sum_probs = jnp.sum(_exp_t(na0 - mid, t2), axis=1, keepdims=True)
            update = (sum_probs < 1.0).astype(jnp.float32)
            lower = lower * update + (1.0 - update) * mid
            upper = upper * (1.0 - update) + update * mid
        mid = (upper + lower) * 0.5
        base = 1.0 + one_m_t2 * (na0 - mid)

    base = jnp.maximum(base, 0.0)
    pos = base > 0.0
    logb = jnp.log(jnp.maximum(base, 1e-38))      # one full-tile log, reused
    inv = 1.0 / one_m_t2
    probs = jnp.where(pos, jnp.exp(inv * logb), 0.0)

    def pow_fn(p):
        if p == 1.0:
            return probs
        return jnp.where(pos, jnp.exp((float(p) * inv) * logb), 0.0)

    def logp_fn():
        return inv * logb                          # log(probs) where probs > 0

    return probs, pow_fn, logp_fn


# -----------------------------------------------------------------------------
# Kernel: one row-tile per grid step, per-row losses written to the tile's own
# output block (independent across steps -> "parallel" grid axis).
# -----------------------------------------------------------------------------
def _btl_kernel(pred_ref, tgt_ref, out_ref, *, t1, t2, num_iters,
                label_smoothing, n_total, tile_n):
    i = pl.program_id(0)

    pred = pred_ref[...].astype(jnp.float32)        # (TILE_N, C) f32
    tgt = tgt_ref[...]                              # (TILE_N, 1) int32
    tn, c = pred.shape

    probs, pow_probs, log_probs = _tempered_softmax(pred, t2, num_iters)

    col = lax.broadcasted_iota(jnp.int32, (tn, c), 1)
    is_tgt = col == tgt                             # (TILE_N, C) bool

    inv_2mt1 = 1.0 / (2.0 - t1)
    prob_pow_sum = jnp.sum(pow_probs(2.0 - t1), axis=1, keepdims=True)

    if label_smoothing > 0.0:
        # Smoothed labels (applied deterministically, i.e. smoothing_p == 1.0).
        off = label_smoothing / (c - 1)
        on = 1.0 - label_smoothing * c / (c - 1) + off
        sum_lo = on + (c - 1) * off
        # Label-only terms are data-independent -> one trace-time constant:
        #   sum_c [ lo*log_t(lo+1e-10) - lo**(2-t1)/(2-t1) ]
        const_label = (on * _log_t_const(on + 1e-10, t1)
                       + (c - 1) * off * _log_t_const(off + 1e-10, t1)
                       - (on ** (2.0 - t1)
                          + (c - 1) * off ** (2.0 - t1)) * inv_2mt1)
        # Cross term sum_c lo * log_t(probs, t1) without materializing lo.
        if t1 == 1.0:
            lp = log_probs()
            s_lp = jnp.sum(lp, axis=1, keepdims=True)
            lp_tgt = jnp.sum(jnp.where(is_tgt, lp, 0.0), axis=1, keepdims=True)
            cross = off * s_lp + (on - off) * lp_tgt
        else:
            pp = pow_probs(1.0 - t1)                # probs**(1-t1), log reused
            s_pp = jnp.sum(pp, axis=1, keepdims=True)
            pp_tgt = jnp.sum(jnp.where(is_tgt, pp, 0.0), axis=1, keepdims=True)
            cross = (off * s_pp + (on - off) * pp_tgt - sum_lo) / (1.0 - t1)
        row_loss = const_label - cross + prob_pow_sum * inv_2mt1
    else:
        # Hard one-hot labels: closed-form per-row loss, no one-hot tile.
        log_t_one = _log_t_const(1.0 + 1e-10, t1)
        p_t = jnp.sum(jnp.where(is_tgt, probs, 0.0), axis=1, keepdims=True)
        row_loss = ((log_t_one - inv_2mt1)
                    - _log_t(p_t, t1)
                    + prob_pow_sum * inv_2mt1)      # (TILE_N, 1)

    # Mask rows beyond the true batch size (last partial tile reads padding).
    row_id = i * tile_n + lax.broadcasted_iota(jnp.int32, (tn, 1), 0)
    out_ref[...] = jnp.where(row_id < n_total, row_loss, 0.0)


def _round_up(x, m):
    return ((x + m - 1) // m) * m


def bi_tempered_logistic_loss(pred, target, *, t1, t2, label_smoothing=0.0,
                              num_iters=5, reduction="none", tile_n=None):
    """pred: (N, C) logits (any float dtype); target: (N,) int class ids.

    Returns the scalar produced by BiTemperedLogisticLoss.forward
    ('none'/'mean' -> batch mean, 'sum' -> batch sum; the module applies a
    final .mean() so even 'none' collapses to the mean).
    """
    n, c = pred.shape
    tgt2d = target.astype(jnp.int32).reshape(n, 1)

    itemsize = jnp.dtype(pred.dtype).itemsize
    sublane = {1: 32, 2: 16}.get(itemsize, 8)       # bf16 needs 16-row tiles
    if tile_n is None:
        # Budget counts the f32 temporaries, not just the input buffer:
        # ~1 MiB per (tile_n, C) f32 tile keeps the (several-live) unrolled
        # normalization working set + double-buffered inputs well inside the
        # 32 MiB scoped-VMEM limit on v5e/v6e/v7x.
        tile_n = (1024 * 1024) // max(1, c * 4)
        tile_n = max(sublane, min(2048, tile_n))
    tile_n = min(int(tile_n), _round_up(n, sublane))
    tile_n = max(sublane, (tile_n // sublane) * sublane)
    num_tiles = int(pl.cdiv(n, tile_n))
    padded_n = num_tiles * tile_n

    kernel = functools.partial(
        _btl_kernel, t1=float(t1), t2=float(t2), num_iters=int(num_iters),
        label_smoothing=float(label_smoothing), n_total=int(n),
        tile_n=int(tile_n))

    per_row = pl.pallas_call(
        kernel,
        out_shape=jax.ShapeDtypeStruct((padded_n, 1), jnp.float32),
        grid_spec=pltpu.PrefetchScalarGridSpec(
            num_scalar_prefetch=0,
            grid=(num_tiles,),
            in_specs=[
                pl.BlockSpec((tile_n, c), lambda i: (i, 0)),   # logits tile
                pl.BlockSpec((tile_n, 1), lambda i: (i, 0)),   # labels tile
            ],
            out_specs=pl.BlockSpec((tile_n, 1), lambda i: (i, 0)),  # per-row
        ),
        compiler_params=pltpu.CompilerParams(
            dimension_semantics=("parallel",),   # independent tiles -> 2 TCs on v7x
            vmem_limit_bytes=32 * 1024 * 1024),
    )(pred, tgt2d)

    total = jnp.sum(per_row)                       # padded rows are exact zeros
    if reduction == "sum":
        return total
    # 'mean' and 'none' (the module's forward applies .mean()).
    return total / jnp.float32(n)


if __name__ == "__main__":
    key = jax.random.PRNGKey(0)

    def reference(pred, target, t1, t2, label_smoothing=0.0, num_iters=5,
                  reduction="none"):
        """Pure-JAX transliteration of the PyTorch module (forward + .mean())."""
        pred = pred.astype(jnp.float32)
        n, c = pred.shape

        def log_t(u, t):
            return jnp.log(u) if t == 1.0 else (u ** (1.0 - t) - 1.0) / (1.0 - t)

        def exp_t(u, t):
            if t == 1.0:
                return jnp.exp(u)
            return jnp.maximum(1.0 + (1.0 - t) * u, 0.0) ** (1.0 / (1.0 - t))

        onehot = jax.nn.one_hot(target, c, dtype=jnp.float32)
        if label_smoothing > 0.0:
            onehot = ((1.0 - label_smoothing * c / (c - 1)) * onehot
                      + label_smoothing / (c - 1))

        if t2 == 1.0:
            probs = jax.nn.softmax(pred, axis=-1)
        elif t2 > 1.0:
            mu = jnp.max(pred, axis=-1, keepdims=True)
            na0 = pred - mu
            na = na0
            for _ in range(num_iters):
                z = jnp.sum(exp_t(na, t2), axis=-1, keepdims=True)
                na = na0 * z ** (1.0 - t2)
            z = jnp.sum(exp_t(na, t2), axis=-1, keepdims=True)
            norm = -log_t(1.0 / z, t2) + mu
            probs = exp_t(pred - norm, t2)
        else:
            mu = jnp.max(pred, axis=-1, keepdims=True)
            na = pred - mu
            eff = jnp.sum((na > -1.0 / (1.0 - t2)).astype(jnp.float32),
                          axis=-1, keepdims=True)
            lower = jnp.zeros_like(mu)
            upper = -log_t(1.0 / eff, t2) * jnp.ones_like(lower)
            for _ in range(num_iters):
                mid = (upper + lower) / 2.0
                sp = jnp.sum(exp_t(na - mid, t2), axis=-1, keepdims=True)
                upd = (sp < 1.0).astype(jnp.float32)
                lower = lower * upd + (1.0 - upd) * mid
                upper = upper * (1.0 - upd) + upd * mid
            norm = (upper + lower) / 2.0 + mu
            probs = exp_t(pred - norm, t2)

        lv = (onehot * log_t(onehot + 1e-10, t1)
              - onehot * log_t(probs, t1)
              - onehot ** (2.0 - t1) / (2.0 - t1)
              + probs ** (2.0 - t1) / (2.0 - t1))
        lv = jnp.sum(lv, axis=-1)
        if reduction == "sum":
            return jnp.sum(lv)          # .mean() of a scalar is a no-op
        return jnp.mean(lv)             # 'none'/'mean' -> module's final .mean()

    k1, k2, k3, k4 = jax.random.split(key, 4)

    # --- test 1: heavy-tail t2 > 1, single tile (batch=8, n_classes=5) -------
    n1, c1 = 8, 5
    pred1 = jax.random.normal(k1, (n1, c1), dtype=jnp.float32) * 2.0
    tgt1 = jax.random.randint(k2, (n1,), 0, c1, dtype=jnp.int32)
    got1 = bi_tempered_logistic_loss(pred1, tgt1, t1=0.8, t2=1.4,
                                     reduction="none")
    jax.block_until_ready(got1)
    want1 = reference(pred1, tgt1, 0.8, 1.4, reduction="none")
    assert jnp.allclose(got1, want1, rtol=1e-3, atol=1e-5), (got1, want1)

    # --- test 2: finite-support t2 < 1, multi-tile grid with a partial tile --
    n2, c2 = 20, 5
    pred2 = jax.random.normal(k3, (n2, c2), dtype=jnp.float32) * 3.0
    tgt2 = jax.random.randint(k4, (n2,), 0, c2, dtype=jnp.int32)
    got2 = bi_tempered_logistic_loss(pred2, tgt2, t1=0.9, t2=0.7,
                                     reduction="sum", tile_n=8)
    jax.block_until_ready(got2)
    want2 = reference(pred2, tgt2, 0.9, 0.7, reduction="sum")
    assert jnp.allclose(got2, want2, rtol=1e-3, atol=1e-4), (got2, want2)

    # --- test 3: label-smoothing path (deterministic, smoothing_p == 1.0) ----
    got3 = bi_tempered_logistic_loss(pred1, tgt1, t1=0.8, t2=1.2,
                                     label_smoothing=0.1, reduction="mean")
    jax.block_until_ready(got3)
    want3 = reference(pred1, tgt1, 0.8, 1.2, label_smoothing=0.1,
                      reduction="mean")
    assert jnp.allclose(got3, want3, rtol=1e-3, atol=1e-5), (got3, want3)

    print("KERNEL_OK")
</pallas_src>

<mosaic_0001>
module attributes {stable_mosaic.version = 11 : i64} {
  func.func @_btl_kernel(%arg0: i32, %arg1: memref<8x5xf32, #tpu.memory_space<vmem>>, %arg2: memref<8x1xi32, #tpu.memory_space<vmem>>, %arg3: memref<8x1xf32, #tpu.memory_space<vmem>>) attributes {dimension_semantics = [#tpu.dimension_semantics<parallel>], iteration_bounds = array<i64: 1>, scalar_prefetch = 0 : i64, scratch_operands = 0 : i64, tpu.core_type = #tpu.core_type<tc>, window_params = [{transform_indices = @transform_0, window_bounds = array<i64: 8, 5>}, {transform_indices = @transform_1, window_bounds = array<i64: 8, 1>}, {transform_indices = @transform_2, window_bounds = array<i64: 8, 1>}]} {
    %c0 = arith.constant 0 : index
    %c0_0 = arith.constant 0 : index
    %0 = vector.load %arg1[%c0, %c0_0] : memref<8x5xf32, #tpu.memory_space<vmem>>, vector<8x5xf32>
    %c0_1 = arith.constant 0 : index
    %c0_2 = arith.constant 0 : index
    %1 = vector.load %arg2[%c0_1, %c0_2] : memref<8x1xi32, #tpu.memory_space<vmem>>, vector<8x1xi32>
    %cst = arith.constant dense<0xFF800000> : vector<8xf32>
    %2 = vector.multi_reduction <maximumf>, %0, %cst [1] : vector<8x5xf32> to vector<8xf32>
    %3 = vector.shape_cast %2 : vector<8xf32> to vector<8x1xf32>
    %4 = vector.broadcast %3 : vector<8x1xf32> to vector<8x5xf32>
    %5 = arith.subf %0, %4 : vector<8x5xf32>
    %cst_3 = arith.constant -4.000000e-01 : f32
    %6 = vector.broadcast %cst_3 : f32 to vector<8x5xf32>
    %7 = arith.mulf %6, %5 : vector<8x5xf32>
    %cst_4 = arith.constant 1.000000e+00 : f32
    %8 = vector.broadcast %cst_4 : f32 to vector<8x5xf32>
    %9 = arith.addf %8, %7 : vector<8x5xf32>
    %cst_5 = arith.constant 0.000000e+00 : f32
    %10 = vector.broadcast %cst_5 : f32 to vector<8x5xf32>
    %11 = arith.maximumf %9, %10 : vector<8x5xf32>
    %cst_6 = arith.constant 9.99999935E-39 : f32
    %12 = vector.broadcast %cst_6 : f32 to vector<8x5xf32>
    %13 = arith.maximumf %11, %12 : vector<8x5xf32>
    %cst_7 = arith.constant 0.000000e+00 : f32
    %14 = vector.broadcast %cst_7 : f32 to vector<8x5xf32>
    %15 = arith.cmpf ogt, %11, %14 : vector<8x5xf32>
    %16 = math.log %13 : vector<8x5xf32>
    %cst_8 = arith.constant -2.500000e+00 : f32
    %17 = vector.broadcast %cst_8 : f32 to vector<8x5xf32>
    %18 = arith.mulf %17, %16 : vector<8x5xf32>
    %19 = math.exp %18 : vector<8x5xf32>
    %cst_9 = arith.constant 0.000000e+00 : f32
    %20 = vector.broadcast %cst_9 : f32 to vector<8x5xf32>
    %21 = arith.select %15, %19, %20 : vector<8x5xi1>, vector<8x5xf32>
    %cst_10 = arith.constant dense<0.000000e+00> : vector<8xf32>
    %22 = vector.multi_reduction <add>, %21, %cst_10 [1] : vector<8x5xf32> to vector<8xf32>
    %23 = vector.shape_cast %22 : vector<8xf32> to vector<8x1xf32>
    %cst_11 = arith.constant 9.99999935E-39 : f32
    %24 = vector.broadcast %cst_11 : f32 to vector<8x1xf32>
    %25 = arith.maximumf %23, %24 : vector<8x1xf32>
    %cst_12 = arith.constant 0.000000e+00 : f32
    %26 = vector.broadcast %cst_12 : f32 to vector<8x1xf32>
    %27 = arith.cmpf ogt, %23, %26 : vector<8x1xf32>
    %28 = math.log %25 : vector<8x1xf32>
    %cst_13 = arith.constant -4.000000e-01 : f32
    %29 = vector.broadcast %cst_13 : f32 to vector<8x1xf32>
    %30 = arith.mulf %29, %28 : vector<8x1xf32>
    %31 = math.exp %30 : vector<8x1xf32>
    %cst_14 = arith.constant 0.000000e+00 : f32
    %32 = vector.broadcast %cst_14 : f32 to vector<8x1xf32>
    %33 = arith.select %27, %31, %32 : vector<8x1xi1>, vector<8x1xf32>
    %34 = vector.broadcast %33 : vector<8x1xf32> to vector<8x5xf32>
    %35 = arith.mulf %5, %34 : vector<8x5xf32>
    %cst_15 = arith.constant -4.000000e-01 : f32
    %36 = vector.broadcast %cst_15 : f32 to vector<8x5xf32>
    %37 = arith.mulf %36, %35 : vector<8x5xf32>
    %cst_16 = arith.constant 1.000000e+00 : f32
    %38 = vector.broadcast %cst_16 : f32 to vector<8x5xf32>
    %39 = arith.addf %38, %37 : vector<8x5xf32>
    %cst_17 = arith.constant 0.000000e+00 : f32
    %40 = vector.broadcast %cst_17 : f32 to vector<8x5xf32>
    %41 = arith.maximumf %39, %40 : vector<8x5xf32>
    %cst_18 = arith.constant 9.99999935E-39 : f32
    %42 = vector.broadcast %cst_18 : f32 to vector<8x5xf32>
    %43 = arith.maximumf %41, %42 : vector<8x5xf32>
    %cst_19 = arith.constant 0.000000e+00 : f32
    %44 = vector.broadcast %cst_19 : f32 to vector<8x5xf32>
    %45 = arith.cmpf ogt, %41, %44 : vector<8x5xf32>
    %46 = math.log %43 : vector<8x5xf32>
    %cst_20 = arith.constant -2.500000e+00 : f32
    %47 = vector.broadcast %cst_20 : f32 to vector<8x5xf32>
    %48 = arith.mulf %47, %46 : vector<8x5xf32>
    %49 = math.exp %48 : vector<8x5xf32>
    %cst_21 = arith.constant 0.000000e+00 : f32
    %50 = vector.broadcast %cst_21 : f32 to vector<8x5xf32>
    %51 = arith.select %45, %49, %50 : vector<8x5xi1>, vector<8x5xf32>
    %cst_22 = arith.constant dense<0.000000e+00> : vector<8xf32>
    %52 = vector.multi_reduction <add>, %51, %cst_22 [1] : vector<8x5xf32> to vector<8xf32>
    %53 = vector.shape_cast %52 : vector<8xf32> to vector<8x1xf32>
    %cst_23 = arith.constant 9.99999935E-39 : f32
    %54 = vector.broadcast %cst_23 : f32 to vector<8x1xf32>
    %55 = arith.maximumf %53, %54 : vector<8x1xf32>
    %cst_24 = arith.constant 0.000000e+00 : f32
    %56 = vector.broadcast %cst_24 : f32 to vector<8x1xf32>
    %57 = arith.cmpf ogt, %53, %56 : vector<8x1xf32>
    %58 = math.log %55 : vector<8x1xf32>
    %cst_25 = arith.constant -4.000000e-01 : f32
    %59 = vector.broadcast %cst_25 : f32 to vector<8x1xf32>
    %60 = arith.mulf %59, %58 : vector<8x1xf32>
    %61 = math.exp %60 : vector<8x1xf32>
    %cst_26 = arith.constant 0.000000e+00 : f32
    %62 = vector.broadcast %cst_26 : f32 to vector<8x1xf32>
    %63 = arith.select %57, %61, %62 : vector<8x1xi1>, vector<8x1xf32>
    %64 = vector.broadcast %63 : vector<8x1xf32> to vector<8x5xf32>
    %65 = arith.mulf %5, %64 : vector<8x5xf32>
    %cst_27 = arith.constant -4.000000e-01 : f32
    %66 = vector.broadcast %cst_27 : f32 to vector<8x5xf32>
    %67 = arith.mulf %66, %65 : vector<8x5xf32>
    %cst_28 = arith.constant 1.000000e+00 : f32
    %68 = vector.broadcast %cst_28 : f32 to vector<8x5xf32>
    %69 = arith.addf %68, %67 : vector<8x5xf32>
    %cst_29 = arith.constant 0.000000e+00 : f32
    %70 = vector.broadcast %cst_29 : f32 to vector<8x5xf32>
    %71 = arith.maximumf %69, %70 : vector<8x5xf32>
    %cst_30 = arith.constant 9.99999935E-39 : f32
    %72 = vector.broadcast %cst_30 : f32 to vector<8x5xf32>
    %73 = arith.maximumf %71, %72 : vector<8x5xf32>
    %cst_31 = arith.constant 0.000000e+00 : f32
    %74 = vector.broadcast %cst_31 : f32 to vector<8x5xf32>
    %75 = arith.cmpf ogt, %71, %74 : vector<8x5xf32>
    %76 = math.log %73 : vector<8x5xf32>
    %cst_32 = arith.constant -2.500000e+00 : f32
    %77 = vector.broadcast %cst_32 : f32 to vector<8x5xf32>
    %78 = arith.mulf %77, %76 : vector<8x5xf32>
    %79 = math.exp %78 : vector<8x5xf32>
    %cst_33 = arith.constant 0.000000e+00 : f32
    %80 = vector.broadcast %cst_33 : f32 to vector<8x5xf32>
    %81 = arith.select %75, %79, %80 : vector<8x5xi1>, vector<8x5xf32>
    %cst_34 = arith.constant dense<0.000000e+00> : vector<8xf32>
    %82 = vector.multi_reduction <add>, %81, %cst_34 [1] : vector<8x5xf32> to vector<8xf32>
    %83 = vector.shape_cast %82 : vector<8xf32> to vector<8x1xf32>
    %cst_35 = arith.constant 9.99999935E-39 : f32
    %84 = vector.broadcast %cst_35 : f32 to vector<8x1xf32>
    %85 = arith.maximumf %83, %84 : vector<8x1xf32>
    %cst_36 = arith.constant 0.000000e+00 : f32
    %86 = vector.broadcast %cst_36 : f32 to vector<8x1xf32>
    %87 = arith.cmpf ogt, %83, %86 : vector<8x1xf32>
    %88 = math.log %85 : vector<8x1xf32>
    %cst_37 = arith.constant -4.000000e-01 : f32
    %89 = vector.broadcast %cst_37 : f32 to vector<8x1xf32>
    %90 = arith.mulf %89, %88 : vector<8x1xf32>
    %91 = math.exp %90 : vector<8x1xf32>
    %cst_38 = arith.constant 0.000000e+00 : f32
    %92 = vector.broadcast %cst_38 : f32 to vector<8x1xf32>
    %93 = arith.select %87, %91, %92 : vector<8x1xi1>, vector<8x1xf32>
    %94 = vector.broadcast %93 : vector<8x1xf32> to vector<8x5xf32>
    %95 = arith.mulf %5, %94 : vector<8x5xf32>
    %cst_39 = arith.constant -4.000000e-01 : f32
    %96 = vector.broadcast %cst_39 : f32 to vector<8x5xf32>
    %97 = arith.mulf %96, %95 : vector<8x5xf32>
    %cst_40 = arith.constant 1.000000e+00 : f32
    %98 = vector.broadcast %cst_40 : f32 to vector<8x5xf32>
    %99 = arith.addf %98, %97 : vector<8x5xf32>
    %cst_41 = arith.constant 0.000000e+00 : f32
    %100 = vector.broadcast %cst_41 : f32 to vector<8x5xf32>
    %101 = arith.maximumf %99, %100 : vector<8x5xf32>
    %cst_42 = arith.constant 9.99999935E-39 : f32
    %102 = vector.broadcast %cst_42 : f32 to vector<8x5xf32>
    %103 = arith.maximumf %101, %102 : vector<8x5xf32>
    %cst_43 = arith.constant 0.000000e+00 : f32
    %104 = vector.broadcast %cst_43 : f32 to vector<8x5xf32>
    %105 = arith.cmpf ogt, %101, %104 : vector<8x5xf32>
    %106 = math.log %103 : vector<8x5xf32>
    %cst_44 = arith.constant -2.500000e+00 : f32
    %107 = vector.broadcast %cst_44 : f32 to vector<8x5xf32>
    %108 = arith.mulf %107, %106 : vector<8x5xf32>
    %109 = math.exp %108 : vector<8x5xf32>
    %cst_45 = arith.constant 0.000000e+00 : f32
    %110 = vector.broadcast %cst_45 : f32 to vector<8x5xf32>
    %111 = arith.select %105, %109, %110 : vector<8x5xi1>, vector<8x5xf32>
    %cst_46 = arith.constant dense<0.000000e+00> : vector<8xf32>
    %112 = vector.multi_reduction <add>, %111, %cst_46 [1] : vector<8x5xf32> to vector<8xf32>
    %113 = vector.shape_cast %112 : vector<8xf32> to vector<8x1xf32>
    %cst_47 = arith.constant 9.99999935E-39 : f32
    %114 = vector.broadcast %cst_47 : f32 to vector<8x1xf32>
    %115 = arith.maximumf %113, %114 : vector<8x1xf32>
    %cst_48 = arith.constant 0.000000e+00 : f32
    %116 = vector.broadcast %cst_48 : f32 to vector<8x1xf32>
    %117 = arith.cmpf ogt, %113, %116 : vector<8x1xf32>
    %118 = math.log %115 : vector<8x1xf32>
    %cst_49 = arith.constant -4.000000e-01 : f32
    %119 = vector.broadcast %cst_49 : f32 to vector<8x1xf32>
    %120 = arith.mulf %119, %118 : vector<8x1xf32>
    %121 = math.exp %120 : vector<8x1xf32>
    %cst_50 = arith.constant 0.000000e+00 : f32
    %122 = vector.broadcast %cst_50 : f32 to vector<8x1xf32>
    %123 = arith.select %117, %121, %122 : vector<8x1xi1>, vector<8x1xf32>
    %124 = vector.broadcast %123 : vector<8x1xf32> to vector<8x5xf32>
    %125 = arith.mulf %5, %124 : vector<8x5xf32>
    %cst_51 = arith.constant -4.000000e-01 : f32
    %126 = vector.broadcast %cst_51 : f32 to vector<8x5xf32>
    %127 = arith.mulf %126, %125 : vector<8x5xf32>
    %cst_52 = arith.constant 1.000000e+00 : f32
    %128 = vector.broadcast %cst_52 : f32 to vector<8x5xf32>
    %129 = arith.addf %128, %127 : vector<8x5xf32>
    %cst_53 = arith.constant 0.000000e+00 : f32
    %130 = vector.broadcast %cst_53 : f32 to vector<8x5xf32>
    %131 = arith.maximumf %129, %130 : vector<8x5xf32>
    %cst_54 = arith.constant 9.99999935E-39 : f32
    %132 = vector.broadcast %cst_54 : f32 to vector<8x5xf32>
    %133 = arith.maximumf %131, %132 : vector<8x5xf32>
    %cst_55 = arith.constant 0.000000e+00 : f32
    %134 = vector.broadcast %cst_55 : f32 to vector<8x5xf32>
    %135 = arith.cmpf ogt, %131, %134 : vector<8x5xf32>
    %136 = math.log %133 : vector<8x5xf32>
    %cst_56 = arith.constant -2.500000e+00 : f32
    %137 = vector.broadcast %cst_56 : f32 to vector<8x5xf32>
    %138 = arith.mulf %137, %136 : vector<8x5xf32>
    %139 = math.exp %138 : vector<8x5xf32>
    %cst_57 = arith.constant 0.000000e+00 : f32
    %140 = vector.broadcast %cst_57 : f32 to vector<8x5xf32>
    %141 = arith.select %135, %139, %140 : vector<8x5xi1>, vector<8x5xf32>
    %cst_58 = arith.constant dense<0.000000e+00> : vector<8xf32>
    %142 = vector.multi_reduction <add>, %141, %cst_58 [1] : vector<8x5xf32> to vector<8xf32>
    %143 = vector.shape_cast %142 : vector<8xf32> to vector<8x1xf32>
    %cst_59 = arith.constant 9.99999935E-39 : f32
    %144 = vector.broadcast %cst_59 : f32 to vector<8x1xf32>
    %145 = arith.maximumf %143, %144 : vector<8x1xf32>
    %cst_60 = arith.constant 0.000000e+00 : f32
    %146 = vector.broadcast %cst_60 : f32 to vector<8x1xf32>
    %147 = arith.cmpf ogt, %143, %146 : vector<8x1xf32>
    %148 = math.log %145 : vector<8x1xf32>
    %cst_61 = arith.constant -4.000000e-01 : f32
    %149 = vector.broadcast %cst_61 : f32 to vector<8x1xf32>
    %150 = arith.mulf %149, %148 : vector<8x1xf32>
    %151 = math.exp %150 : vector<8x1xf32>
    %cst_62 = arith.constant 0.000000e+00 : f32
    %152 = vector.broadcast %cst_62 : f32 to vector<8x1xf32>
    %153 = arith.select %147, %151, %152 : vector<8x1xi1>, vector<8x1xf32>
    %154 = vector.broadcast %153 : vector<8x1xf32> to vector<8x5xf32>
    %155 = arith.mulf %5, %154 : vector<8x5xf32>
    %cst_63 = arith.constant -4.000000e-01 : f32
    %156 = vector.broadcast %cst_63 : f32 to vector<8x5xf32>
    %157 = arith.mulf %156, %155 : vector<8x5xf32>
    %cst_64 = arith.constant 1.000000e+00 : f32
    %158 = vector.broadcast %cst_64 : f32 to vector<8x5xf32>
    %159 = arith.addf %158, %157 : vector<8x5xf32>
    %cst_65 = arith.constant 0.000000e+00 : f32
    %160 = vector.broadcast %cst_65 : f32 to vector<8x5xf32>
    %161 = arith.maximumf %159, %160 : vector<8x5xf32>
    %cst_66 = arith.constant 9.99999935E-39 : f32
    %162 = vector.broadcast %cst_66 : f32 to vector<8x5xf32>
    %163 = arith.maximumf %161, %162 : vector<8x5xf32>
    %cst_67 = arith.constant 0.000000e+00 : f32
    %164 = vector.broadcast %cst_67 : f32 to vector<8x5xf32>
    %165 = arith.cmpf ogt, %161, %164 : vector<8x5xf32>
    %166 = math.log %163 : vector<8x5xf32>
    %cst_68 = arith.constant -2.500000e+00 : f32
    %167 = vector.broadcast %cst_68 : f32 to vector<8x5xf32>
    %168 = arith.mulf %167, %166 : vector<8x5xf32>
    %169 = math.exp %168 : vector<8x5xf32>
    %cst_69 = arith.constant 0.000000e+00 : f32
    %170 = vector.broadcast %cst_69 : f32 to vector<8x5xf32>
    %171 = arith.select %165, %169, %170 : vector<8x5xi1>, vector<8x5xf32>
    %cst_70 = arith.constant dense<0.000000e+00> : vector<8xf32>
    %172 = vector.multi_reduction <add>, %171, %cst_70 [1] : vector<8x5xf32> to vector<8xf32>
    %173 = vector.shape_cast %172 : vector<8xf32> to vector<8x1xf32>
    %cst_71 = arith.constant -4.000000e-01 : f32
    %174 = vector.broadcast %cst_71 : f32 to vector<8x5xf32>
    %175 = arith.mulf %174, %5 : vector<8x5xf32>
    %cst_72 = arith.constant 9.99999935E-39 : f32
    %176 = vector.broadcast %cst_72 : f32 to vector<8x1xf32>
    %177 = arith.maximumf %173, %176 : vector<8x1xf32>
    %cst_73 = arith.constant 0.000000e+00 : f32
    %178 = vector.broadcast %cst_73 : f32 to vector<8x1xf32>
    %179 = arith.cmpf ogt, %173, %178 : vector<8x1xf32>
    %180 = math.log %177 : vector<8x1xf32>
    %cst_74 = arith.constant 4.000000e-01 : f32
    %181 = vector.broadcast %cst_74 : f32 to vector<8x1xf32>
    %182 = arith.mulf %181, %180 : vector<8x1xf32>
    %183 = math.exp %182 : vector<8x1xf32>
    %cst_75 = arith.constant 0.000000e+00 : f32
    %184 = vector.broadcast %cst_75 : f32 to vector<8x1xf32>
    %185 = arith.select %179, %183, %184 : vector<8x1xi1>, vector<8x1xf32>
    %186 = vector.broadcast %185 : vector<8x1xf32> to vector<8x5xf32>
    %187 = arith.addf %175, %186 : vector<8x5xf32>
    %cst_76 = arith.constant 0.000000e+00 : f32
    %188 = vector.broadcast %cst_76 : f32 to vector<8x5xf32>
    %189 = arith.maximumf %187, %188 : vector<8x5xf32>
    %cst_77 = arith.constant 0.000000e+00 : f32
    %190 = vector.broadcast %cst_77 : f32 to vector<8x5xf32>
    %191 = arith.cmpf ogt, %189, %190 : vector<8x5xf32>
    %cst_78 = arith.constant 9.99999935E-39 : f32
    %192 = vector.broadcast %cst_78 : f32 to vector<8x5xf32>
    %193 = arith.maximumf %189, %192 : vector<8x5xf32>
    %194 = math.log %193 : vector<8x5xf32>
    %cst_79 = arith.constant -2.500000e+00 : f32
    %195 = vector.broadcast %cst_79 : f32 to vector<8x5xf32>
    %196 = arith.mulf %195, %194 : vector<8x5xf32>
    %197 = math.exp %196 : vector<8x5xf32>
    %cst_80 = arith.constant 0.000000e+00 : f32
    %198 = vector.broadcast %cst_80 : f32 to vector<8x5xf32>
    %199 = arith.select %191, %197, %198 : vector<8x5xi1>, vector<8x5xf32>
    %200 = tpu.iota {dimensions = array<i32: 1>} : vector<8x5xi32>
    %201 = vector.broadcast %1 : vector<8x1xi32> to vector<8x5xi32>
    %202 = arith.cmpi eq, %200, %201 : vector<8x5xi32>
    %cst_81 = arith.constant -3.000000e+00 : f32
    %203 = vector.broadcast %cst_81 : f32 to vector<8x5xf32>
    %204 = arith.mulf %203, %194 : vector<8x5xf32>
    %205 = math.exp %204 : vector<8x5xf32>
    %cst_82 = arith.constant 0.000000e+00 : f32
    %206 = vector.broadcast %cst_82 : f32 to vector<8x5xf32>
    %207 = arith.select %191, %205, %206 : vector<8x5xi1>, vector<8x5xf32>
    %cst_83 = arith.constant dense<0.000000e+00> : vector<8xf32>
    %208 = vector.multi_reduction <add>, %207, %cst_83 [1] : vector<8x5xf32> to vector<8xf32>
    %209 = vector.shape_cast %208 : vector<8xf32> to vector<8x1xf32>
    %cst_84 = arith.constant 0.000000e+00 : f32
    %210 = vector.broadcast %cst_84 : f32 to vector<8x5xf32>
    %211 = arith.select %202, %199, %210 : vector<8x5xi1>, vector<8x5xf32>
    %cst_85 = arith.constant dense<0.000000e+00> : vector<8xf32>
    %212 = vector.multi_reduction <add>, %211, %cst_85 [1] : vector<8x5xf32> to vector<8xf32>
    %213 = vector.shape_cast %212 : vector<8xf32> to vector<8x1xf32>
    %cst_86 = arith.constant 9.99999935E-39 : f32
    %214 = vector.broadcast %cst_86 : f32 to vector<8x1xf32>
    %215 = arith.maximumf %213, %214 : vector<8x1xf32>
    %cst_87 = arith.constant 0.000000e+00 : f32
    %216 = vector.broadcast %cst_87 : f32 to vector<8x1xf32>
    %217 = arith.cmpf ogt, %213, %216 : vector<8x1xf32>
    %218 = math.log %215 : vector<8x1xf32>
    %cst_88 = arith.constant 2.000000e-01 : f32
    %219 = vector.broadcast %cst_88 : f32 to vector<8x1xf32>
    %220 = arith.mulf %219, %218 : vector<8x1xf32>
    %221 = math.exp %220 : vector<8x1xf32>
    %cst_89 = arith.constant 0.000000e+00 : f32
    %222 = vector.broadcast %cst_89 : f32 to vector<8x1xf32>
    %223 = arith.select %217, %221, %222 : vector<8x1xi1>, vector<8x1xf32>
    %cst_90 = arith.constant 1.000000e+00 : f32
    %224 = vector.broadcast %cst_90 : f32 to vector<8x1xf32>
    %225 = arith.subf %223, %224 : vector<8x1xf32>
    %cst_91 = arith.constant 2.000000e-01 : f32
    %226 = vector.broadcast %cst_91 : f32 to vector<8x1xf32>
    %227 = arith.divf %225, %226 : vector<8x1xf32>
    %cst_92 = arith.constant -0.833333313 : f32
    %228 = vector.broadcast %cst_92 : f32 to vector<8x1xf32>
    %229 = arith.subf %228, %227 : vector<8x1xf32>
    %cst_93 = arith.constant 0.833333313 : f32
    %230 = vector.broadcast %cst_93 : f32 to vector<8x1xf32>
    %231 = arith.mulf %209, %230 : vector<8x1xf32>
    %232 = arith.addf %229, %231 : vector<8x1xf32>
    %c8_i32 = arith.constant 8 : i32
    %233 = arith.muli %arg0, %c8_i32 : i32
    %234 = tpu.iota {dimensions = array<i32: 0>} : vector<8x1xi32>
    %235 = vector.broadcast %233 : i32 to vector<8x1xi32>
    %236 = arith.addi %235, %234 : vector<8x1xi32>
    %c8_i32_94 = arith.constant 8 : i32
    %237 = vector.broadcast %c8_i32_94 : i32 to vector<8x1xi32>
    %238 = arith.cmpi slt, %236, %237 : vector<8x1xi32>
    %cst_95 = arith.constant 0.000000e+00 : f32
    %239 = vector.broadcast %cst_95 : f32 to vector<8x1xf32>
    %240 = arith.select %238, %232, %239 : vector<8x1xi1>, vector<8x1xf32>
    %c0_96 = arith.constant 0 : index
    %c0_97 = arith.constant 0 : index
    %241 = vector.load %arg3[%c0_96, %c0_97] : memref<8x1xf32, #tpu.memory_space<vmem>>, vector<8x1xf32>
    tpu.vector_store %arg3[%c0_96, %c0_97], %240 {strides = array<i32>} : memref<8x1xf32, #tpu.memory_space<vmem>>, vector<8x1xf32>,
    return
  }
  func.func @transform_0(%arg0: i32) -> (i32, i32) {
    %c0_i32 = arith.constant 0 : i32
    %c0_i32_0 = arith.constant 0 : i32
    return %arg0, %c0_i32 : i32, i32
  }
  func.func @transform_1(%arg0: i32) -> (i32, i32) {
    %c0_i32 = arith.constant 0 : i32
    %c0_i32_0 = arith.constant 0 : i32
    return %arg0, %c0_i32 : i32, i32
  }
  func.func @transform_2(%arg0: i32) -> (i32, i32) {
    %c0_i32 = arith.constant 0 : i32
    %c0_i32_0 = arith.constant 0 : i32
    return %arg0, %c0_i32 : i32, i32
  }
}

</mosaic_0001>

<llo_original>
// kernel: tpu_custom_call.1
$region0: #{tpu_custom_call.1}
  #allocation0 [shape = 'u32[]', space=smem, size = 0x4, offset = 0x4, fixed_abs, tag = 'smem constant byte address 0x4 - core index']
  #allocation1 [shape = 'u32[72,128]{1,0:T(1,128)}', space=vmem, size = 0x9000, scoped, tag = 'internal scratch']
  %s0 = inlined_call_operand.vmem [shape: f32[8,5], index: 0, kind: input, shape index: {}]
  %s1 = inlined_call_operand.vmem [shape: s32[8,1], index: 1, kind: input, shape index: {}]
  %s2 = inlined_call_operand.vmem [shape: f32[8,1], index: 2, kind: output, shape index: {}]
  %s3 = sld [smem:[#allocation0]]
  $region18: #{tpu_custom_call.1} parent=0
    _
  %s5 = ssub.s32 1, %s3
  %s6 = scalar_select 0, %s5, %s3
  // Predicated region
  $region2: #{tpu_custom_call.1} parent=0 // pred_check
    _
  $region3: #{tpu_custom_call.1} parent=0 // pred_check_branch
    %8 = sbr.rel (0) target = $region5
  $region4: #{tpu_custom_call.1} parent=0 // pred_region
    _
  $region5: #{tpu_custom_call.1} parent=0 // pred_fallthru
    _
  // Predicated region
  $region6: #{tpu_custom_call.1} parent=0 // pred_check
    _
  $region7: #{tpu_custom_call.1} parent=0 // pred_check_branch
    %10 = sbr.rel (0) target = $region9
  $region8: #{tpu_custom_call.1} parent=0 // pred_region
    _
  $region9: #{tpu_custom_call.1} parent=0 // pred_fallthru
    _
  %v11 = vld [vmem:[%s0] sm:$0xff]
  %v12 = vld [vmem:[%s1] sm:$0xff]
  %vm13 = vcmask 39936
  %v14 = vsel %vm13, %v11, -inf
  %15 = vmax.xlane.f32.xlu0 %v14
  %v16 = vpop.xlane.xlu0 %15
  %v17 = vsub.f32 %v11, %v16
  %v18 = vmul.f32 %v17, -0.4
  %v19 = vadd.f32 %v18, 1.0
  %v20 = vmax.f32 %v19, 0.0
  %v21 = vmax.f32 %v20, 1e-38
  %vm22 = vcmp.gt.f32.partialorder %v20, 0.0
  %v23 = vlog2.pop %v21
  %v24 = vmul.f32 %v23, 0.6931472
  %v25 = vmul.f32 %v24, -2.5
  %v26 = vmul.f32 %v25, 1.442695
  %v27 = vpow.pop %v26
  %v28 = vsel %vm22, %v27, 0.0
  %v29 = vsel %vm13, %v28, 0.0
  %30 = vadd.xlane.f32.xlu0 %v29
  %v31 = vpop.xlane.xlu0 %30
  %v32 = vmax.f32 %v31, 1e-38
  %vm33 = vcmp.gt.f32.partialorder %v31, 0.0
  %v34 = vlog2.pop %v32
  %v35 = vmul.f32 %v34, 0.6931472
  %v36 = vmul.f32 %v35, -0.4
  %v37 = vmul.f32 %v36, 1.442695
  %v38 = vpow.pop %v37
  %v39 = vsel %vm33, %v38, 0.0
  %v40 = vmul.f32 %v17, %v39
  %v41 = vmul.f32 %v40, -0.4
  %v42 = vadd.f32 %v41, 1.0
  %v43 = vmax.f32 %v42, 0.0
  %v44 = vmax.f32 %v43, 1e-38
  %vm45 = vcmp.gt.f32.partialorder %v43, 0.0
  %v46 = vlog2.pop %v44
  %v47 = vmul.f32 %v46, 0.6931472
  %v48 = vmul.f32 %v47, -2.5
  %v49 = vmul.f32 %v48, 1.442695
  %v50 = vpow.pop %v49
  %v51 = vsel %vm45, %v50, 0.0
  %v52 = vsel %vm13, %v51, 0.0
  %53 = vadd.xlane.f32.xlu0 %v52
  %v54 = vpop.xlane.xlu0 %53
  %v55 = vmax.f32 %v54, 1e-38
  %vm56 = vcmp.gt.f32.partialorder %v54, 0.0
  %v57 = vlog2.pop %v55
  %v58 = vmul.f32 %v57, 0.6931472
  %v59 = vmul.f32 %v58, -0.4
  %v60 = vmul.f32 %v59, 1.442695
  %v61 = vpow.pop %v60
  %v62 = vsel %vm56, %v61, 0.0
  %v63 = vmul.f32 %v17, %v62
  %v64 = vmul.f32 %v63, -0.4
  %v65 = vadd.f32 %v64, 1.0
  %v66 = vmax.f32 %v65, 0.0
  %v67 = vmax.f32 %v66, 1e-38
  %vm68 = vcmp.gt.f32.partialorder %v66, 0.0
  %v69 = vlog2.pop %v67
  %v70 = vmul.f32 %v69, 0.6931472
  %v71 = vmul.f32 %v70, -2.5
  %v72 = vmul.f32 %v71, 1.442695
  %v73 = vpow.pop %v72
  %v74 = vsel %vm68, %v73, 0.0
  %v75 = vsel %vm13, %v74, 0.0
  %76 = vadd.xlane.f32.xlu0 %v75
  %v77 = vpop.xlane.xlu0 %76
  %v78 = vmax.f32 %v77, 1e-38
  %vm79 = vcmp.gt.f32.partialorder %v77, 0.0
  %v80 = vlog2.pop %v78
  %v81 = vmul.f32 %v80, 0.6931472
  %v82 = vmul.f32 %v81, -0.4
  %v83 = vmul.f32 %v82, 1.442695
  %v84 = vpow.pop %v83
  %v85 = vsel %vm79, %v84, 0.0
  %v86 = vmul.f32 %v17, %v85
  %v87 = vmul.f32 %v86, -0.4
  %v88 = vadd.f32 %v87, 1.0
  %v89 = vmax.f32 %v88, 0.0
  %v90 = vmax.f32 %v89, 1e-38
  %vm91 = vcmp.gt.f32.partialorder %v89, 0.0
  %v92 = vlog2.pop %v90
  %v93 = vmul.f32 %v92, 0.6931472
  %v94 = vmul.f32 %v93, -2.5
  %v95 = vmul.f32 %v94, 1.442695
  %v96 = vpow.pop %v95
  %v97 = vsel %vm91, %v96, 0.0
  %v98 = vsel %vm13, %v97, 0.0
  %99 = vadd.xlane.f32.xlu0 %v98
  %v100 = vpop.xlane.xlu0 %99
  %v101 = vmax.f32 %v100, 1e-38
  %vm102 = vcmp.gt.f32.partialorder %v100, 0.0
  %v103 = vlog2.pop %v101
  %v104 = vmul.f32 %v103, 0.6931472
  %v105 = vmul.f32 %v104, -0.4
  %v106 = vmul.f32 %v105, 1.442695
  %v107 = vpow.pop %v106
  %v108 = vsel %vm102, %v107, 0.0
  %v109 = vmul.f32 %v17, %v108
  %v110 = vmul.f32 %v109, -0.4
  %v111 = vadd.f32 %v110, 1.0
  %v112 = vmax.f32 %v111, 0.0
  %v113 = vmax.f32 %v112, 1e-38
  %vm114 = vcmp.gt.f32.partialorder %v112, 0.0
  %v115 = vlog2.pop %v113
  %v116 = vmul.f32 %v115, 0.6931472
  %v117 = vmul.f32 %v116, -2.5
  %v118 = vmul.f32 %v117, 1.442695
  %v119 = vpow.pop %v118
  %v120 = vsel %vm114, %v119, 0.0
  %v121 = vsel %vm13, %v120, 0.0
  %122 = vadd.xlane.f32.xlu0 %v121
  %v123 = vpop.xlane.xlu0 %122
  %v124 = vmax.f32 %v123, 1e-38
  %vm125 = vcmp.gt.f32.partialorder %v123, 0.0
  %v126 = vlog2.pop %v124
  %v127 = vmul.f32 %v126, 0.6931472
  %v128 = vmul.f32 %v127, -0.4
  %v129 = vmul.f32 %v128, 1.442695
  %v130 = vpow.pop %v129
  %v131 = vsel %vm125, %v130, 0.0
  %v132 = vmul.f32 %v17, %v131
  %v133 = vmul.f32 %v132, -0.4
  %v134 = vadd.f32 %v133, 1.0
  %v135 = vmax.f32 %v134, 0.0
  %v136 = vmax.f32 %v135, 1e-38
  %vm137 = vcmp.gt.f32.partialorder %v135, 0.0
  %v138 = vlog2.pop %v136
  %v139 = vmul.f32 %v138, 0.6931472
  %v140 = vmul.f32 %v139, -2.5
  %v141 = vmul.f32 %v140, 1.442695
  %v142 = vpow.pop %v141
  %v143 = vsel %vm137, %v142, 0.0
  %v144 = vsel %vm13, %v143, 0.0
  %145 = vadd.xlane.f32.xlu0 %v144
  %v146 = vpop.xlane.xlu0 %145
  %v147 = vmax.f32 %v146, 1e-38
  %vm148 = vcmp.gt.f32.partialorder %v146, 0.0
  %v149 = vlog2.pop %v147
  %v150 = vmul.f32 %v149, 0.6931472
  %v151 = vmul.f32 %v150, 0.4
  %v152 = vmul.f32 %v151, 1.442695
  %v153 = vpow.pop %v152
  %v154 = vsel %vm148, %v153, 0.0
  %v155 = vadd.f32 %v18, %v154
  %v156 = vmax.f32 %v155, 0.0
  %vm157 = vcmp.gt.f32.partialorder %v156, 0.0
  %v158 = vmax.f32 %v156, 1e-38
  %v159 = vlog2.pop %v158
  %v160 = vmul.f32 %v159, 0.6931472
  %v161 = vmul.f32 %v160, -2.5
  %v162 = vmul.f32 %v161, 1.442695
  %v163 = vpow.pop %v162
  %v164 = vsel %vm157, %v163, 0.0
  %v165 = vlaneseq
  %v166 = vand.u32 %v165, 127
  %167 = vset.pattern.permute.xlu0 0
  %168 = vperm.xlu0 %167, %v12
  %v169 = vpop.permute.xlu0 %168
  %vm170 = vcmp.eq.s32.totalorder %v166, %v169
  %v171 = vmul.f32 %v160, -3.0
  %v172 = vmul.f32 %v171, 1.442695
  %v173 = vpow.pop %v172
  %v174 = vsel %vm157, %v173, 0.0
  %v175 = vsel %vm13, %v174, 0.0
  %176 = vadd.xlane.f32.xlu0 %v175
  %v177 = vpop.xlane.xlu0 %176
  %v178 = vsel %vm170, %v164, 0.0
  %v179 = vsel %vm13, %v178, 0.0
  %180 = vadd.xlane.f32.xlu0 %v179
  %v181 = vpop.xlane.xlu0 %180
  %v182 = vmax.f32 %v181, 1e-38
  %vm183 = vcmp.gt.f32.partialorder %v181, 0.0
  %v184 = vlog2.pop %v182
  %v185 = vmul.f32 %v184, 0.6931472
  %v186 = vmul.f32 %v185, 0.2
  %v187 = vmul.f32 %v186, 1.442695
  %v188 = vpow.pop %v187
  %v189 = vsel %vm183, %v188, 0.0
  %v190 = vsub.f32 %v189, 1.0
  %v191 = vrcp.pop 0.2
  %v192 = vmul.f32 0.2, %v191
  %v193 = vsub.f32 1.0, %v192
  %v194 = vmul.f32 %v191, %v193
  %v195 = vadd.f32 %v191, %v194
  %vm196 = vweird.f32 %v191
  %v197 = vsel %vm196, %v191, %v195
  %v198 = vmul.f32 %v190, %v197
  %v199 = vsub.f32 -0.8333333, %v198
  %v200 = vmul.f32 %v177, 0.8333333
  %v201 = vadd.f32 %v199, %v200
  %s202 = smul.u32 0, 8
  %v203 = vlaneseq
  %v204 = vshrl.u32 %v203, 7
  %v205 = vstv %s202
  %v206 = vadd.s32 %v205, %v204
  %vm207 = vcmp.lt.s32.totalorder %v206, 8
  %v208 = vsel %vm207, %v201, 0.0
  %vm209 = vcmask 7168
  %210 = vst.msk [vmem:[%s2] sm:$0xff] %vm209, %v208
  // Predicated region
  $region10: #{tpu_custom_call.1} parent=0 // pred_check
    _
  $region11: #{tpu_custom_call.1} parent=0 // pred_check_branch
    %212 = sbr.rel (0) target = $region13
  $region12: #{tpu_custom_call.1} parent=0 // pred_region
    _
  $region13: #{tpu_custom_call.1} parent=0 // pred_fallthru
    _
  // Predicated region
  $region14: #{tpu_custom_call.1} parent=0 // pred_check
    _
  $region15: #{tpu_custom_call.1} parent=0 // pred_check_branch
    %214 = sbr.rel (0) target = $region17
  $region16: #{tpu_custom_call.1} parent=0 // pred_region
    _
  $region17: #{tpu_custom_call.1} parent=0 // pred_fallthru
    _

</llo_original>
